<compile_context>
chip_gen: v5e
topology: v5e:2x2
jax: 0.10.0
libtpu: 0.0.40
codegen_flags: <defaults>
</compile_context>

<pallas_src>
import functools

import numpy as np
import jax
import jax.numpy as jnp
from jax.experimental import pallas as pl
from jax.experimental.pallas import tpu as pltpu


# ----------------------------------------------------------------------------
# Pallas kernel
# ----------------------------------------------------------------------------
def yolo_loss_kernel(pred_ref, tgt_ref, out_ref, acc_ref, *, S, B,
                     lambda_coord, lambda_noobj, inv_batch):
    # pred_ref / tgt_ref : (N_fields, TILE_ROWS, 128) f32 VMEM blocks
    # out_ref            : (8, 128) f32 block (one per core; filled at the end)
    # acc_ref            : (TILE_ROWS, 128) f32 VMEM scratch (per-core running sum)
    i = pl.program_id(1)

    @pl.when(i == 0)
    def _():
        acc_ref[...] = jnp.zeros_like(acc_ref)

    inv_S = 1.0 / float(S)
    n_fields = pred_ref.shape[0]

    tconf = tgt_ref[4]                       # (TR, 128) dense tile
    coord_mask = tconf > 0.0
    noobj_mask = tconf == 0.0
    zeros = jnp.zeros_like(tconf)

    # ---- no-object confidence term (conf fields 4 + 5*b) --------------------
    noobj_sq = zeros
    for b in range(B):
        d = pred_ref[4 + 5 * b] - tgt_ref[4 + 5 * b]
        noobj_sq = noobj_sq + d * d

    # ---- class term (fields 5*B .. N) ---------------------------------------
    cls_sq = zeros
    for f in range(5 * B, n_fields):
        d = pred_ref[f] - tgt_ref[f]
        cls_sq = cls_sq + d * d

    # ---- target box 0 in xyxy ------------------------------------------------
    tx, ty, tw, th = tgt_ref[0], tgt_ref[1], tgt_ref[2], tgt_ref[3]
    t_x1 = tx * inv_S - 0.5 * tw
    t_y1 = ty * inv_S - 0.5 * th
    t_x2 = tx * inv_S + 0.5 * tw
    t_y2 = ty * inv_S + 0.5 * th
    area_t = (t_x2 - t_x1) * (t_y2 - t_y1)

    # ---- per-box IoU vs target box 0; carry running "best" values -----------
    best_iou = None
    best = None   # (px, py, pw, ph, pc, tx_b, ty_b, tw_b, th_b)
    for b in range(B):
        px, py, pw, ph, pc = (pred_ref[5 * b + k] for k in range(5))
        p_x1 = px * inv_S - 0.5 * pw
        p_y1 = py * inv_S - 0.5 * ph
        p_x2 = px * inv_S + 0.5 * pw
        p_y2 = py * inv_S + 0.5 * ph
        iw = jnp.maximum(jnp.minimum(p_x2, t_x2) - jnp.maximum(p_x1, t_x1), 0.0)
        ih = jnp.maximum(jnp.minimum(p_y2, t_y2) - jnp.maximum(p_y1, t_y1), 0.0)
        inter = iw * ih
        area_p = (p_x2 - p_x1) * (p_y2 - p_y1)
        # Exact divide (not approx reciprocal) to keep best-box selection /
        # loss_obj bit-close to the torch reference. 0/0 NaNs only appear in
        # non-coord / padded cells and are masked out by the jnp.where below.
        iou = inter / (area_p + area_t - inter)
        cand = (px, py, pw, ph, pc,
                tgt_ref[5 * b + 0], tgt_ref[5 * b + 1],
                tgt_ref[5 * b + 2], tgt_ref[5 * b + 3])
        if b == 0:
            best_iou, best = iou, cand
        else:
            better = iou > best_iou            # first max wins (torch/argmax)
            best_iou = jnp.where(better, iou, best_iou)
            best = tuple(jnp.where(better, c, p) for c, p in zip(cand, best))

    r_px, r_py, r_pw, r_ph, r_pc, r_tx, r_ty, r_tw, r_th = best

    d_xy = (r_px - r_tx) ** 2 + (r_py - r_ty) ** 2
    d_wh = ((jnp.sqrt(r_pw) - jnp.sqrt(r_tw)) ** 2 +
            (jnp.sqrt(r_ph) - jnp.sqrt(r_th)) ** 2)
    d_obj = (r_pc - best_iou) ** 2

    # Pre-weighted per-cell loss; ONE dense accumulation per grid step.
    coord_terms = lambda_coord * (d_xy + d_wh) + d_obj + cls_sq
    step = (jnp.where(coord_mask, coord_terms, zeros) +
            lambda_noobj * jnp.where(noobj_mask, noobj_sq, zeros))

    acc_ref[...] = acc_ref[...] + step

    # Single cross-lane reduction + output write, only at the last tile.
    @pl.when(i == pl.num_programs(1) - 1)
    def _():
        total = jnp.sum(acc_ref[...], keepdims=True) * inv_batch   # (1, 1)
        out_ref[...] = jnp.broadcast_to(total, out_ref.shape)


# ----------------------------------------------------------------------------
# Wrapper
# ----------------------------------------------------------------------------
def yolo_loss(pred, target, *, S, B, lambda_coord, lambda_noobj,
              tile_rows=8, num_cores=2):
    batch_size, s1, s2, n = pred.shape
    assert s1 == S and s2 == S and n == 5 * B + 10

    M = batch_size * S * S
    tile_cells = tile_rows * 128
    n_tiles = max(1, (M + tile_cells - 1) // tile_cells)
    tiles_per_core = (n_tiles + num_cores - 1) // num_cores
    total_tiles = tiles_per_core * num_cores
    Mpad = total_tiles * tile_cells
    Rpad = Mpad // 128

    # TODO(synk): ideally the producer would emit this (N_fields, R, 128)
    # layout directly; here we repack (one transpose + small zero pad) in XLA.
    def prep(x):
        x2 = x.reshape(M, n).astype(jnp.float32)
        x2 = jnp.pad(x2, ((0, Mpad - M), (0, 0)))      # padded cells -> all-zero
        return x2.T.reshape(n, Rpad, 128)

    pred_t = prep(pred)
    tgt_t = prep(target)

    kernel = functools.partial(
        yolo_loss_kernel, S=S, B=B,
        lambda_coord=float(lambda_coord), lambda_noobj=float(lambda_noobj),
        inv_batch=1.0 / float(batch_size))

    in_spec = pl.BlockSpec((n, tile_rows, 128),
                           lambda c, i: (0, c * tiles_per_core + i, 0))

    out = pl.pallas_call(
        kernel,
        out_shape=jax.ShapeDtypeStruct((num_cores * 8, 128), jnp.float32),
        grid=(num_cores, tiles_per_core),
        in_specs=[in_spec, in_spec],
        out_specs=pl.BlockSpec((8, 128), lambda c, i: (c, 0)),
        scratch_shapes=[pltpu.VMEM((tile_rows, 128), jnp.float32)],
        compiler_params=pltpu.CompilerParams(
            dimension_semantics=("parallel", "arbitrary"),
            vmem_limit_bytes=32 * 1024 * 1024),
    )(pred_t, tgt_t)

    # Each core's (8,128) block is filled with its already-/batch partial sum.
    return jnp.sum(out[::8, 0])


# ----------------------------------------------------------------------------
# Independent NumPy reference mirroring the PyTorch code literally
# ----------------------------------------------------------------------------
def yolo_loss_numpy_ref(pred, target, *, S, B, lambda_coord, lambda_noobj):
    pred = np.asarray(pred, dtype=np.float32)
    target = np.asarray(target, dtype=np.float32)
    N = 5 * B + 10
    batch_size = pred.shape[0]
    coord_mask = target[..., 4] > 0
    noobj_mask = target[..., 4] == 0

    coord_pred = pred[coord_mask].reshape(-1, N)
    bbox_pred = coord_pred[:, :5 * B].reshape(-1, 5)
    class_pred = coord_pred[:, 5 * B:]
    coord_target = target[coord_mask].reshape(-1, N)
    bbox_target = coord_target[:, :5 * B].reshape(-1, 5)
    class_target = coord_target[:, 5 * B:]

    noobj_pred = pred[noobj_mask].reshape(-1, N)
    noobj_target = target[noobj_mask].reshape(-1, N)
    conf_idx = [4 + 5 * b for b in range(B)]
    loss_noobj = np.sum((noobj_pred[:, conf_idx] - noobj_target[:, conf_idx]) ** 2)

    def compute_iou(box1, box2):
        lt = np.maximum(box1[:, None, :2], box2[None, :, :2])
        rb = np.minimum(box1[:, None, 2:], box2[None, :, 2:])
        wh = np.clip(rb - lt, 0.0, None)
        inter = wh[..., 0] * wh[..., 1]
        a1 = (box1[:, 2] - box1[:, 0]) * (box1[:, 3] - box1[:, 1])
        a2 = (box2[:, 2] - box2[:, 0]) * (box2[:, 3] - box2[:, 1])
        return inter / (a1[:, None] + a2[None, :] - inter)

    loss_xy = loss_wh = loss_obj = 0.0
    for i in range(0, bbox_target.shape[0], B):
        pr = bbox_pred[i:i + B]
        pr_xyxy = np.zeros((pr.shape[0], 4), np.float32)
        pr_xyxy[:, :2] = pr[:, :2] / float(S) - 0.5 * pr[:, 2:4]
        pr_xyxy[:, 2:4] = pr[:, :2] / float(S) + 0.5 * pr[:, 2:4]
        tg = bbox_target[i:i + 1]
        tg_xyxy = np.zeros((1, 4), np.float32)
        tg_xyxy[:, :2] = tg[:, :2] / float(S) - 0.5 * tg[:, 2:4]
        tg_xyxy[:, 2:4] = tg[:, :2] / float(S) + 0.5 * tg[:, 2:4]
        iou = compute_iou(pr_xyxy, tg_xyxy)           # (B, 1)
        r = int(np.argmax(iou[:, 0]))
        max_iou = iou[r, 0]
        pr_r = bbox_pred[i + r]
        tg_r = bbox_target[i + r]
        loss_xy += float(np.sum((pr_r[:2] - tg_r[:2]) ** 2))
        loss_wh += float(np.sum((np.sqrt(pr_r[2:4]) - np.sqrt(tg_r[2:4])) ** 2))
        loss_obj += float((pr_r[4] - max_iou) ** 2)

    loss_class = float(np.sum((class_pred - class_target) ** 2))
    loss = (lambda_coord * (loss_xy + loss_wh) + loss_obj
            + lambda_noobj * loss_noobj + loss_class)
    return loss / float(batch_size)


# ----------------------------------------------------------------------------
if __name__ == "__main__":
    S, B = 7, 2
    lambda_coord, lambda_noobj = 5.0, 0.5
    batch = 2
    N = 5 * B + 10                      # 20
    n_classes = N - 5 * B               # 10

    key = jax.random.PRNGKey(0)
    k1, k2, k3, k4 = jax.random.split(key, 4)

    # pred: positive everywhere so sqrt(w), sqrt(h) are well defined
    pred = jax.random.uniform(k1, (batch, S, S, N), minval=0.05, maxval=0.95,
                              dtype=jnp.float32)

    # target: ~30% of cells contain an object; both anchor slots share the gt box
    obj = (jax.random.uniform(k2, (batch, S, S)) < 0.3).astype(jnp.float32)
    box = jax.random.uniform(k3, (batch, S, S, 4), minval=0.05, maxval=0.95,
                             dtype=jnp.float32)
    cls_idx = jax.random.randint(k4, (batch, S, S), 0, n_classes)
    cls_onehot = jax.nn.one_hot(cls_idx, n_classes, dtype=jnp.float32)
    conf = jnp.ones((batch, S, S, 1), jnp.float32)
    box_block = jnp.concatenate([box, conf], axis=-1)                 # (b,S,S,5)
    target = jnp.concatenate([box_block, box_block, cls_onehot], -1)  # (b,S,S,20)
    target = target * obj[..., None]

    loss = yolo_loss(pred, target, S=S, B=B,
                     lambda_coord=lambda_coord, lambda_noobj=lambda_noobj)
    loss = jax.block_until_ready(loss)

    ref = yolo_loss_numpy_ref(np.asarray(pred), np.asarray(target), S=S, B=B,
                              lambda_coord=lambda_coord,
                              lambda_noobj=lambda_noobj)
    np.testing.assert_allclose(float(loss), float(ref), rtol=2e-3, atol=2e-3)

    print("KERNEL_OK")
</pallas_src>

<mosaic_0001>
module attributes {stable_mosaic.version = 11 : i64} {
  func.func @yolo_loss_kernel(%arg0: i32, %arg1: i32, %arg2: memref<20x8x128xf32, #tpu.memory_space<vmem>>, %arg3: memref<20x8x128xf32, #tpu.memory_space<vmem>>, %arg4: memref<8x128xf32, #tpu.memory_space<vmem>>, %arg5: memref<8x128xf32, #tpu.memory_space<vmem>>) attributes {dimension_semantics = [#tpu.dimension_semantics<parallel>, #tpu.dimension_semantics<arbitrary>], iteration_bounds = array<i64: 2, 1>, scalar_prefetch = 0 : i64, scratch_operands = 1 : i64, tpu.core_type = #tpu.core_type<tc>, window_params = [{transform_indices = @transform_0, window_bounds = array<i64: 20, 8, 128>}, {transform_indices = @transform_1, window_bounds = array<i64: 20, 8, 128>}, {transform_indices = @transform_2, window_bounds = array<i64: 8, 128>}]} {
    %c0_i32 = arith.constant 0 : i32
    %0 = arith.cmpi eq, %arg1, %c0_i32 : i32
    %1 = arith.extui %0 : i1 to i32
    %c0_i32_0 = arith.constant 0 : i32
    %2 = arith.cmpi ne, %1, %c0_i32_0 : i32
    scf.if %2 {
      %cst_160 = arith.constant 0.000000e+00 : f32
      %278 = vector.broadcast %cst_160 : f32 to vector<8x128xf32>
      %c0_161 = arith.constant 0 : index
      %c0_162 = arith.constant 0 : index
      %279 = vector.load %arg5[%c0_161, %c0_162] : memref<8x128xf32, #tpu.memory_space<vmem>>, vector<8x128xf32>
      tpu.vector_store %arg5[%c0_161, %c0_162], %278 {strides = array<i32>} : memref<8x128xf32, #tpu.memory_space<vmem>>, vector<8x128xf32>,
    } else {
    }
    %c4 = arith.constant 4 : index
    %c0 = arith.constant 0 : index
    %c0_1 = arith.constant 0 : index
    %3 = vector.load %arg3[%c4, %c0, %c0_1] : memref<20x8x128xf32, #tpu.memory_space<vmem>>, vector<1x8x128xf32>
    %4 = vector.shape_cast %3 : vector<1x8x128xf32> to vector<8x128xf32>
    %cst = arith.constant 0.000000e+00 : f32
    %5 = vector.broadcast %cst : f32 to vector<8x128xf32>
    %6 = arith.cmpf ogt, %4, %5 : vector<8x128xf32>
    %cst_2 = arith.constant 0.000000e+00 : f32
    %7 = vector.broadcast %cst_2 : f32 to vector<8x128xf32>
    %8 = arith.cmpf oeq, %4, %7 : vector<8x128xf32>
    %cst_3 = arith.constant 0.000000e+00 : f32
    %9 = vector.broadcast %cst_3 : f32 to vector<8x128xf32>
    %c4_4 = arith.constant 4 : index
    %c0_5 = arith.constant 0 : index
    %c0_6 = arith.constant 0 : index
    %10 = vector.load %arg2[%c4_4, %c0_5, %c0_6] : memref<20x8x128xf32, #tpu.memory_space<vmem>>, vector<1x8x128xf32>
    %11 = vector.shape_cast %10 : vector<1x8x128xf32> to vector<8x128xf32>
    %c4_7 = arith.constant 4 : index
    %c0_8 = arith.constant 0 : index
    %c0_9 = arith.constant 0 : index
    %12 = vector.load %arg3[%c4_7, %c0_8, %c0_9] : memref<20x8x128xf32, #tpu.memory_space<vmem>>, vector<1x8x128xf32>
    %13 = vector.shape_cast %12 : vector<1x8x128xf32> to vector<8x128xf32>
    %14 = arith.subf %11, %13 : vector<8x128xf32>
    %15 = arith.mulf %14, %14 : vector<8x128xf32>
    %16 = arith.addf %9, %15 : vector<8x128xf32>
    %c9 = arith.constant 9 : index
    %c0_10 = arith.constant 0 : index
    %c0_11 = arith.constant 0 : index
    %17 = vector.load %arg2[%c9, %c0_10, %c0_11] : memref<20x8x128xf32, #tpu.memory_space<vmem>>, vector<1x8x128xf32>
    %18 = vector.shape_cast %17 : vector<1x8x128xf32> to vector<8x128xf32>
    %c9_12 = arith.constant 9 : index
    %c0_13 = arith.constant 0 : index
    %c0_14 = arith.constant 0 : index
    %19 = vector.load %arg3[%c9_12, %c0_13, %c0_14] : memref<20x8x128xf32, #tpu.memory_space<vmem>>, vector<1x8x128xf32>
    %20 = vector.shape_cast %19 : vector<1x8x128xf32> to vector<8x128xf32>
    %21 = arith.subf %18, %20 : vector<8x128xf32>
    %22 = arith.mulf %21, %21 : vector<8x128xf32>
    %23 = arith.addf %16, %22 : vector<8x128xf32>
    %c10 = arith.constant 10 : index
    %c0_15 = arith.constant 0 : index
    %c0_16 = arith.constant 0 : index
    %24 = vector.load %arg2[%c10, %c0_15, %c0_16] : memref<20x8x128xf32, #tpu.memory_space<vmem>>, vector<1x8x128xf32>
    %25 = vector.shape_cast %24 : vector<1x8x128xf32> to vector<8x128xf32>
    %c10_17 = arith.constant 10 : index
    %c0_18 = arith.constant 0 : index
    %c0_19 = arith.constant 0 : index
    %26 = vector.load %arg3[%c10_17, %c0_18, %c0_19] : memref<20x8x128xf32, #tpu.memory_space<vmem>>, vector<1x8x128xf32>
    %27 = vector.shape_cast %26 : vector<1x8x128xf32> to vector<8x128xf32>
    %28 = arith.subf %25, %27 : vector<8x128xf32>
    %29 = arith.mulf %28, %28 : vector<8x128xf32>
    %30 = arith.addf %9, %29 : vector<8x128xf32>
    %c11 = arith.constant 11 : index
    %c0_20 = arith.constant 0 : index
    %c0_21 = arith.constant 0 : index
    %31 = vector.load %arg2[%c11, %c0_20, %c0_21] : memref<20x8x128xf32, #tpu.memory_space<vmem>>, vector<1x8x128xf32>
    %32 = vector.shape_cast %31 : vector<1x8x128xf32> to vector<8x128xf32>
    %c11_22 = arith.constant 11 : index
    %c0_23 = arith.constant 0 : index
    %c0_24 = arith.constant 0 : index
    %33 = vector.load %arg3[%c11_22, %c0_23, %c0_24] : memref<20x8x128xf32, #tpu.memory_space<vmem>>, vector<1x8x128xf32>
    %34 = vector.shape_cast %33 : vector<1x8x128xf32> to vector<8x128xf32>
    %35 = arith.subf %32, %34 : vector<8x128xf32>
    %36 = arith.mulf %35, %35 : vector<8x128xf32>
    %37 = arith.addf %30, %36 : vector<8x128xf32>
    %c12 = arith.constant 12 : index
    %c0_25 = arith.constant 0 : index
    %c0_26 = arith.constant 0 : index
    %38 = vector.load %arg2[%c12, %c0_25, %c0_26] : memref<20x8x128xf32, #tpu.memory_space<vmem>>, vector<1x8x128xf32>
    %39 = vector.shape_cast %38 : vector<1x8x128xf32> to vector<8x128xf32>
    %c12_27 = arith.constant 12 : index
    %c0_28 = arith.constant 0 : index
    %c0_29 = arith.constant 0 : index
    %40 = vector.load %arg3[%c12_27, %c0_28, %c0_29] : memref<20x8x128xf32, #tpu.memory_space<vmem>>, vector<1x8x128xf32>
    %41 = vector.shape_cast %40 : vector<1x8x128xf32> to vector<8x128xf32>
    %42 = arith.subf %39, %41 : vector<8x128xf32>
    %43 = arith.mulf %42, %42 : vector<8x128xf32>
    %44 = arith.addf %37, %43 : vector<8x128xf32>
    %c13 = arith.constant 13 : index
    %c0_30 = arith.constant 0 : index
    %c0_31 = arith.constant 0 : index
    %45 = vector.load %arg2[%c13, %c0_30, %c0_31] : memref<20x8x128xf32, #tpu.memory_space<vmem>>, vector<1x8x128xf32>
    %46 = vector.shape_cast %45 : vector<1x8x128xf32> to vector<8x128xf32>
    %c13_32 = arith.constant 13 : index
    %c0_33 = arith.constant 0 : index
    %c0_34 = arith.constant 0 : index
    %47 = vector.load %arg3[%c13_32, %c0_33, %c0_34] : memref<20x8x128xf32, #tpu.memory_space<vmem>>, vector<1x8x128xf32>
    %48 = vector.shape_cast %47 : vector<1x8x128xf32> to vector<8x128xf32>
    %49 = arith.subf %46, %48 : vector<8x128xf32>
    %50 = arith.mulf %49, %49 : vector<8x128xf32>
    %51 = arith.addf %44, %50 : vector<8x128xf32>
    %c14 = arith.constant 14 : index
    %c0_35 = arith.constant 0 : index
    %c0_36 = arith.constant 0 : index
    %52 = vector.load %arg2[%c14, %c0_35, %c0_36] : memref<20x8x128xf32, #tpu.memory_space<vmem>>, vector<1x8x128xf32>
    %53 = vector.shape_cast %52 : vector<1x8x128xf32> to vector<8x128xf32>
    %c14_37 = arith.constant 14 : index
    %c0_38 = arith.constant 0 : index
    %c0_39 = arith.constant 0 : index
    %54 = vector.load %arg3[%c14_37, %c0_38, %c0_39] : memref<20x8x128xf32, #tpu.memory_space<vmem>>, vector<1x8x128xf32>
    %55 = vector.shape_cast %54 : vector<1x8x128xf32> to vector<8x128xf32>
    %56 = arith.subf %53, %55 : vector<8x128xf32>
    %57 = arith.mulf %56, %56 : vector<8x128xf32>
    %58 = arith.addf %51, %57 : vector<8x128xf32>
    %c15 = arith.constant 15 : index
    %c0_40 = arith.constant 0 : index
    %c0_41 = arith.constant 0 : index
    %59 = vector.load %arg2[%c15, %c0_40, %c0_41] : memref<20x8x128xf32, #tpu.memory_space<vmem>>, vector<1x8x128xf32>
    %60 = vector.shape_cast %59 : vector<1x8x128xf32> to vector<8x128xf32>
    %c15_42 = arith.constant 15 : index
    %c0_43 = arith.constant 0 : index
    %c0_44 = arith.constant 0 : index
    %61 = vector.load %arg3[%c15_42, %c0_43, %c0_44] : memref<20x8x128xf32, #tpu.memory_space<vmem>>, vector<1x8x128xf32>
    %62 = vector.shape_cast %61 : vector<1x8x128xf32> to vector<8x128xf32>
    %63 = arith.subf %60, %62 : vector<8x128xf32>
    %64 = arith.mulf %63, %63 : vector<8x128xf32>
    %65 = arith.addf %58, %64 : vector<8x128xf32>
    %c16 = arith.constant 16 : index
    %c0_45 = arith.constant 0 : index
    %c0_46 = arith.constant 0 : index
    %66 = vector.load %arg2[%c16, %c0_45, %c0_46] : memref<20x8x128xf32, #tpu.memory_space<vmem>>, vector<1x8x128xf32>
    %67 = vector.shape_cast %66 : vector<1x8x128xf32> to vector<8x128xf32>
    %c16_47 = arith.constant 16 : index
    %c0_48 = arith.constant 0 : index
    %c0_49 = arith.constant 0 : index
    %68 = vector.load %arg3[%c16_47, %c0_48, %c0_49] : memref<20x8x128xf32, #tpu.memory_space<vmem>>, vector<1x8x128xf32>
    %69 = vector.shape_cast %68 : vector<1x8x128xf32> to vector<8x128xf32>
    %70 = arith.subf %67, %69 : vector<8x128xf32>
    %71 = arith.mulf %70, %70 : vector<8x128xf32>
    %72 = arith.addf %65, %71 : vector<8x128xf32>
    %c17 = arith.constant 17 : index
    %c0_50 = arith.constant 0 : index
    %c0_51 = arith.constant 0 : index
    %73 = vector.load %arg2[%c17, %c0_50, %c0_51] : memref<20x8x128xf32, #tpu.memory_space<vmem>>, vector<1x8x128xf32>
    %74 = vector.shape_cast %73 : vector<1x8x128xf32> to vector<8x128xf32>
    %c17_52 = arith.constant 17 : index
    %c0_53 = arith.constant 0 : index
    %c0_54 = arith.constant 0 : index
    %75 = vector.load %arg3[%c17_52, %c0_53, %c0_54] : memref<20x8x128xf32, #tpu.memory_space<vmem>>, vector<1x8x128xf32>
    %76 = vector.shape_cast %75 : vector<1x8x128xf32> to vector<8x128xf32>
    %77 = arith.subf %74, %76 : vector<8x128xf32>
    %78 = arith.mulf %77, %77 : vector<8x128xf32>
    %79 = arith.addf %72, %78 : vector<8x128xf32>
    %c18 = arith.constant 18 : index
    %c0_55 = arith.constant 0 : index
    %c0_56 = arith.constant 0 : index
    %80 = vector.load %arg2[%c18, %c0_55, %c0_56] : memref<20x8x128xf32, #tpu.memory_space<vmem>>, vector<1x8x128xf32>
    %81 = vector.shape_cast %80 : vector<1x8x128xf32> to vector<8x128xf32>
    %c18_57 = arith.constant 18 : index
    %c0_58 = arith.constant 0 : index
    %c0_59 = arith.constant 0 : index
    %82 = vector.load %arg3[%c18_57, %c0_58, %c0_59] : memref<20x8x128xf32, #tpu.memory_space<vmem>>, vector<1x8x128xf32>
    %83 = vector.shape_cast %82 : vector<1x8x128xf32> to vector<8x128xf32>
    %84 = arith.subf %81, %83 : vector<8x128xf32>
    %85 = arith.mulf %84, %84 : vector<8x128xf32>
    %86 = arith.addf %79, %85 : vector<8x128xf32>
    %c19 = arith.constant 19 : index
    %c0_60 = arith.constant 0 : index
    %c0_61 = arith.constant 0 : index
    %87 = vector.load %arg2[%c19, %c0_60, %c0_61] : memref<20x8x128xf32, #tpu.memory_space<vmem>>, vector<1x8x128xf32>
    %88 = vector.shape_cast %87 : vector<1x8x128xf32> to vector<8x128xf32>
    %c19_62 = arith.constant 19 : index
    %c0_63 = arith.constant 0 : index
    %c0_64 = arith.constant 0 : index
    %89 = vector.load %arg3[%c19_62, %c0_63, %c0_64] : memref<20x8x128xf32, #tpu.memory_space<vmem>>, vector<1x8x128xf32>
    %90 = vector.shape_cast %89 : vector<1x8x128xf32> to vector<8x128xf32>
    %91 = arith.subf %88, %90 : vector<8x128xf32>
    %92 = arith.mulf %91, %91 : vector<8x128xf32>
    %93 = arith.addf %86, %92 : vector<8x128xf32>
    %c0_65 = arith.constant 0 : index
    %c0_66 = arith.constant 0 : index
    %c0_67 = arith.constant 0 : index
    %94 = vector.load %arg3[%c0_65, %c0_66, %c0_67] : memref<20x8x128xf32, #tpu.memory_space<vmem>>, vector<1x8x128xf32>
    %95 = vector.shape_cast %94 : vector<1x8x128xf32> to vector<8x128xf32>
    %c1 = arith.constant 1 : index
    %c0_68 = arith.constant 0 : index
    %c0_69 = arith.constant 0 : index
    %96 = vector.load %arg3[%c1, %c0_68, %c0_69] : memref<20x8x128xf32, #tpu.memory_space<vmem>>, vector<1x8x128xf32>
    %97 = vector.shape_cast %96 : vector<1x8x128xf32> to vector<8x128xf32>
    %c2 = arith.constant 2 : index
    %c0_70 = arith.constant 0 : index
    %c0_71 = arith.constant 0 : index
    %98 = vector.load %arg3[%c2, %c0_70, %c0_71] : memref<20x8x128xf32, #tpu.memory_space<vmem>>, vector<1x8x128xf32>
    %99 = vector.shape_cast %98 : vector<1x8x128xf32> to vector<8x128xf32>
    %c3 = arith.constant 3 : index
    %c0_72 = arith.constant 0 : index
    %c0_73 = arith.constant 0 : index
    %100 = vector.load %arg3[%c3, %c0_72, %c0_73] : memref<20x8x128xf32, #tpu.memory_space<vmem>>, vector<1x8x128xf32>
    %101 = vector.shape_cast %100 : vector<1x8x128xf32> to vector<8x128xf32>
    %cst_74 = arith.constant 0.142857149 : f32
    %102 = vector.broadcast %cst_74 : f32 to vector<8x128xf32>
    %103 = arith.mulf %95, %102 : vector<8x128xf32>
    %cst_75 = arith.constant 5.000000e-01 : f32
    %104 = vector.broadcast %cst_75 : f32 to vector<8x128xf32>
    %105 = arith.mulf %104, %99 : vector<8x128xf32>
    %106 = arith.subf %103, %105 : vector<8x128xf32>
    %cst_76 = arith.constant 0.142857149 : f32
    %107 = vector.broadcast %cst_76 : f32 to vector<8x128xf32>
    %108 = arith.mulf %97, %107 : vector<8x128xf32>
    %cst_77 = arith.constant 5.000000e-01 : f32
    %109 = vector.broadcast %cst_77 : f32 to vector<8x128xf32>
    %110 = arith.mulf %109, %101 : vector<8x128xf32>
    %111 = arith.subf %108, %110 : vector<8x128xf32>
    %cst_78 = arith.constant 0.142857149 : f32
    %112 = vector.broadcast %cst_78 : f32 to vector<8x128xf32>
    %113 = arith.mulf %95, %112 : vector<8x128xf32>
    %cst_79 = arith.constant 5.000000e-01 : f32
    %114 = vector.broadcast %cst_79 : f32 to vector<8x128xf32>
    %115 = arith.mulf %114, %99 : vector<8x128xf32>
    %116 = arith.addf %113, %115 : vector<8x128xf32>
    %cst_80 = arith.constant 0.142857149 : f32
    %117 = vector.broadcast %cst_80 : f32 to vector<8x128xf32>
    %118 = arith.mulf %97, %117 : vector<8x128xf32>
    %cst_81 = arith.constant 5.000000e-01 : f32
    %119 = vector.broadcast %cst_81 : f32 to vector<8x128xf32>
    %120 = arith.mulf %119, %101 : vector<8x128xf32>
    %121 = arith.addf %118, %120 : vector<8x128xf32>
    %122 = arith.subf %116, %106 : vector<8x128xf32>
    %123 = arith.subf %121, %111 : vector<8x128xf32>
    %124 = arith.mulf %122, %123 : vector<8x128xf32>
    %c0_82 = arith.constant 0 : index
    %c0_83 = arith.constant 0 : index
    %c0_84 = arith.constant 0 : index
    %125 = vector.load %arg2[%c0_82, %c0_83, %c0_84] : memref<20x8x128xf32, #tpu.memory_space<vmem>>, vector<1x8x128xf32>
    %126 = vector.shape_cast %125 : vector<1x8x128xf32> to vector<8x128xf32>
    %c1_85 = arith.constant 1 : index
    %c0_86 = arith.constant 0 : index
    %c0_87 = arith.constant 0 : index
    %127 = vector.load %arg2[%c1_85, %c0_86, %c0_87] : memref<20x8x128xf32, #tpu.memory_space<vmem>>, vector<1x8x128xf32>
    %128 = vector.shape_cast %127 : vector<1x8x128xf32> to vector<8x128xf32>
    %c2_88 = arith.constant 2 : index
    %c0_89 = arith.constant 0 : index
    %c0_90 = arith.constant 0 : index
    %129 = vector.load %arg2[%c2_88, %c0_89, %c0_90] : memref<20x8x128xf32, #tpu.memory_space<vmem>>, vector<1x8x128xf32>
    %130 = vector.shape_cast %129 : vector<1x8x128xf32> to vector<8x128xf32>
    %c3_91 = arith.constant 3 : index
    %c0_92 = arith.constant 0 : index
    %c0_93 = arith.constant 0 : index
    %131 = vector.load %arg2[%c3_91, %c0_92, %c0_93] : memref<20x8x128xf32, #tpu.memory_space<vmem>>, vector<1x8x128xf32>
    %132 = vector.shape_cast %131 : vector<1x8x128xf32> to vector<8x128xf32>
    %c4_94 = arith.constant 4 : index
    %c0_95 = arith.constant 0 : index
    %c0_96 = arith.constant 0 : index
    %133 = vector.load %arg2[%c4_94, %c0_95, %c0_96] : memref<20x8x128xf32, #tpu.memory_space<vmem>>, vector<1x8x128xf32>
    %134 = vector.shape_cast %133 : vector<1x8x128xf32> to vector<8x128xf32>
    %cst_97 = arith.constant 0.142857149 : f32
    %135 = vector.broadcast %cst_97 : f32 to vector<8x128xf32>
    %136 = arith.mulf %126, %135 : vector<8x128xf32>
    %cst_98 = arith.constant 5.000000e-01 : f32
    %137 = vector.broadcast %cst_98 : f32 to vector<8x128xf32>
    %138 = arith.mulf %137, %130 : vector<8x128xf32>
    %139 = arith.subf %136, %138 : vector<8x128xf32>
    %cst_99 = arith.constant 0.142857149 : f32
    %140 = vector.broadcast %cst_99 : f32 to vector<8x128xf32>
    %141 = arith.mulf %128, %140 : vector<8x128xf32>
    %cst_100 = arith.constant 5.000000e-01 : f32
    %142 = vector.broadcast %cst_100 : f32 to vector<8x128xf32>
    %143 = arith.mulf %142, %132 : vector<8x128xf32>
    %144 = arith.subf %141, %143 : vector<8x128xf32>
    %cst_101 = arith.constant 0.142857149 : f32
    %145 = vector.broadcast %cst_101 : f32 to vector<8x128xf32>
    %146 = arith.mulf %126, %145 : vector<8x128xf32>
    %cst_102 = arith.constant 5.000000e-01 : f32
    %147 = vector.broadcast %cst_102 : f32 to vector<8x128xf32>
    %148 = arith.mulf %147, %130 : vector<8x128xf32>
    %149 = arith.addf %146, %148 : vector<8x128xf32>
    %cst_103 = arith.constant 0.142857149 : f32
    %150 = vector.broadcast %cst_103 : f32 to vector<8x128xf32>
    %151 = arith.mulf %128, %150 : vector<8x128xf32>
    %cst_104 = arith.constant 5.000000e-01 : f32
    %152 = vector.broadcast %cst_104 : f32 to vector<8x128xf32>
    %153 = arith.mulf %152, %132 : vector<8x128xf32>
    %154 = arith.addf %151, %153 : vector<8x128xf32>
    %155 = arith.minimumf %149, %116 : vector<8x128xf32>
    %156 = arith.maximumf %139, %106 : vector<8x128xf32>
    %157 = arith.subf %155, %156 : vector<8x128xf32>
    %cst_105 = arith.constant 0.000000e+00 : f32
    %158 = vector.broadcast %cst_105 : f32 to vector<8x128xf32>
    %159 = arith.maximumf %157, %158 : vector<8x128xf32>
    %160 = arith.minimumf %154, %121 : vector<8x128xf32>
    %161 = arith.maximumf %144, %111 : vector<8x128xf32>
    %162 = arith.subf %160, %161 : vector<8x128xf32>
    %cst_106 = arith.constant 0.000000e+00 : f32
    %163 = vector.broadcast %cst_106 : f32 to vector<8x128xf32>
    %164 = arith.maximumf %162, %163 : vector<8x128xf32>
    %165 = arith.mulf %159, %164 : vector<8x128xf32>
    %166 = arith.subf %149, %139 : vector<8x128xf32>
    %167 = arith.subf %154, %144 : vector<8x128xf32>
    %168 = arith.mulf %166, %167 : vector<8x128xf32>
    %169 = arith.addf %168, %124 : vector<8x128xf32>
    %170 = arith.subf %169, %165 : vector<8x128xf32>
    %171 = arith.divf %165, %170 : vector<8x128xf32>
    %c0_107 = arith.constant 0 : index
    %c0_108 = arith.constant 0 : index
    %c0_109 = arith.constant 0 : index
    %172 = vector.load %arg3[%c0_107, %c0_108, %c0_109] : memref<20x8x128xf32, #tpu.memory_space<vmem>>, vector<1x8x128xf32>
    %173 = vector.shape_cast %172 : vector<1x8x128xf32> to vector<8x128xf32>
    %c1_110 = arith.constant 1 : index
    %c0_111 = arith.constant 0 : index
    %c0_112 = arith.constant 0 : index
    %174 = vector.load %arg3[%c1_110, %c0_111, %c0_112] : memref<20x8x128xf32, #tpu.memory_space<vmem>>, vector<1x8x128xf32>
    %175 = vector.shape_cast %174 : vector<1x8x128xf32> to vector<8x128xf32>
    %c2_113 = arith.constant 2 : index
    %c0_114 = arith.constant 0 : index
    %c0_115 = arith.constant 0 : index
    %176 = vector.load %arg3[%c2_113, %c0_114, %c0_115] : memref<20x8x128xf32, #tpu.memory_space<vmem>>, vector<1x8x128xf32>
    %177 = vector.shape_cast %176 : vector<1x8x128xf32> to vector<8x128xf32>
    %c3_116 = arith.constant 3 : index
    %c0_117 = arith.constant 0 : index
    %c0_118 = arith.constant 0 : index
    %178 = vector.load %arg3[%c3_116, %c0_117, %c0_118] : memref<20x8x128xf32, #tpu.memory_space<vmem>>, vector<1x8x128xf32>
    %179 = vector.shape_cast %178 : vector<1x8x128xf32> to vector<8x128xf32>
    %c5 = arith.constant 5 : index
    %c0_119 = arith.constant 0 : index
    %c0_120 = arith.constant 0 : index
    %180 = vector.load %arg2[%c5, %c0_119, %c0_120] : memref<20x8x128xf32, #tpu.memory_space<vmem>>, vector<1x8x128xf32>
    %181 = vector.shape_cast %180 : vector<1x8x128xf32> to vector<8x128xf32>
    %c6 = arith.constant 6 : index
    %c0_121 = arith.constant 0 : index
    %c0_122 = arith.constant 0 : index
    %182 = vector.load %arg2[%c6, %c0_121, %c0_122] : memref<20x8x128xf32, #tpu.memory_space<vmem>>, vector<1x8x128xf32>
    %183 = vector.shape_cast %182 : vector<1x8x128xf32> to vector<8x128xf32>
    %c7 = arith.constant 7 : index
    %c0_123 = arith.constant 0 : index
    %c0_124 = arith.constant 0 : index
    %184 = vector.load %arg2[%c7, %c0_123, %c0_124] : memref<20x8x128xf32, #tpu.memory_space<vmem>>, vector<1x8x128xf32>
    %185 = vector.shape_cast %184 : vector<1x8x128xf32> to vector<8x128xf32>
    %c8 = arith.constant 8 : index
    %c0_125 = arith.constant 0 : index
    %c0_126 = arith.constant 0 : index
    %186 = vector.load %arg2[%c8, %c0_125, %c0_126] : memref<20x8x128xf32, #tpu.memory_space<vmem>>, vector<1x8x128xf32>
    %187 = vector.shape_cast %186 : vector<1x8x128xf32> to vector<8x128xf32>
    %c9_127 = arith.constant 9 : index
    %c0_128 = arith.constant 0 : index
    %c0_129 = arith.constant 0 : index
    %188 = vector.load %arg2[%c9_127, %c0_128, %c0_129] : memref<20x8x128xf32, #tpu.memory_space<vmem>>, vector<1x8x128xf32>
    %189 = vector.shape_cast %188 : vector<1x8x128xf32> to vector<8x128xf32>
    %cst_130 = arith.constant 0.142857149 : f32
    %190 = vector.broadcast %cst_130 : f32 to vector<8x128xf32>
    %191 = arith.mulf %181, %190 : vector<8x128xf32>
    %cst_131 = arith.constant 5.000000e-01 : f32
    %192 = vector.broadcast %cst_131 : f32 to vector<8x128xf32>
    %193 = arith.mulf %192, %185 : vector<8x128xf32>
    %194 = arith.subf %191, %193 : vector<8x128xf32>
    %cst_132 = arith.constant 0.142857149 : f32
    %195 = vector.broadcast %cst_132 : f32 to vector<8x128xf32>
    %196 = arith.mulf %183, %195 : vector<8x128xf32>
    %cst_133 = arith.constant 5.000000e-01 : f32
    %197 = vector.broadcast %cst_133 : f32 to vector<8x128xf32>
    %198 = arith.mulf %197, %187 : vector<8x128xf32>
    %199 = arith.subf %196, %198 : vector<8x128xf32>
    %cst_134 = arith.constant 0.142857149 : f32
    %200 = vector.broadcast %cst_134 : f32 to vector<8x128xf32>
    %201 = arith.mulf %181, %200 : vector<8x128xf32>
    %cst_135 = arith.constant 5.000000e-01 : f32
    %202 = vector.broadcast %cst_135 : f32 to vector<8x128xf32>
    %203 = arith.mulf %202, %185 : vector<8x128xf32>
    %204 = arith.addf %201, %203 : vector<8x128xf32>
    %cst_136 = arith.constant 0.142857149 : f32
    %205 = vector.broadcast %cst_136 : f32 to vector<8x128xf32>
    %206 = arith.mulf %183, %205 : vector<8x128xf32>
    %cst_137 = arith.constant 5.000000e-01 : f32
    %207 = vector.broadcast %cst_137 : f32 to vector<8x128xf32>
    %208 = arith.mulf %207, %187 : vector<8x128xf32>
    %209 = arith.addf %206, %208 : vector<8x128xf32>
    %210 = arith.minimumf %204, %116 : vector<8x128xf32>
    %211 = arith.maximumf %194, %106 : vector<8x128xf32>
    %212 = arith.subf %210, %211 : vector<8x128xf32>
    %cst_138 = arith.constant 0.000000e+00 : f32
    %213 = vector.broadcast %cst_138 : f32 to vector<8x128xf32>
    %214 = arith.maximumf %212, %213 : vector<8x128xf32>
    %215 = arith.minimumf %209, %121 : vector<8x128xf32>
    %216 = arith.maximumf %199, %111 : vector<8x128xf32>
    %217 = arith.subf %215, %216 : vector<8x128xf32>
    %cst_139 = arith.constant 0.000000e+00 : f32
    %218 = vector.broadcast %cst_139 : f32 to vector<8x128xf32>
    %219 = arith.maximumf %217, %218 : vector<8x128xf32>
    %220 = arith.mulf %214, %219 : vector<8x128xf32>
    %221 = arith.subf %204, %194 : vector<8x128xf32>
    %222 = arith.subf %209, %199 : vector<8x128xf32>
    %223 = arith.mulf %221, %222 : vector<8x128xf32>
    %224 = arith.addf %223, %124 : vector<8x128xf32>
    %225 = arith.subf %224, %220 : vector<8x128xf32>
    %226 = arith.divf %220, %225 : vector<8x128xf32>
    %c5_140 = arith.constant 5 : index
    %c0_141 = arith.constant 0 : index
    %c0_142 = arith.constant 0 : index
    %227 = vector.load %arg3[%c5_140, %c0_141, %c0_142] : memref<20x8x128xf32, #tpu.memory_space<vmem>>, vector<1x8x128xf32>
    %228 = vector.shape_cast %227 : vector<1x8x128xf32> to vector<8x128xf32>
    %c6_143 = arith.constant 6 : index
    %c0_144 = arith.constant 0 : index
    %c0_145 = arith.constant 0 : index
    %229 = vector.load %arg3[%c6_143, %c0_144, %c0_145] : memref<20x8x128xf32, #tpu.memory_space<vmem>>, vector<1x8x128xf32>
    %230 = vector.shape_cast %229 : vector<1x8x128xf32> to vector<8x128xf32>
    %c7_146 = arith.constant 7 : index
    %c0_147 = arith.constant 0 : index
    %c0_148 = arith.constant 0 : index
    %231 = vector.load %arg3[%c7_146, %c0_147, %c0_148] : memref<20x8x128xf32, #tpu.memory_space<vmem>>, vector<1x8x128xf32>
    %232 = vector.shape_cast %231 : vector<1x8x128xf32> to vector<8x128xf32>
    %c8_149 = arith.constant 8 : index
    %c0_150 = arith.constant 0 : index
    %c0_151 = arith.constant 0 : index
    %233 = vector.load %arg3[%c8_149, %c0_150, %c0_151] : memref<20x8x128xf32, #tpu.memory_space<vmem>>, vector<1x8x128xf32>
    %234 = vector.shape_cast %233 : vector<1x8x128xf32> to vector<8x128xf32>
    %235 = arith.cmpf ogt, %226, %171 : vector<8x128xf32>
    %236 = arith.select %235, %226, %171 : vector<8x128xi1>, vector<8x128xf32>
    %237 = arith.select %235, %181, %126 : vector<8x128xi1>, vector<8x128xf32>
    %238 = arith.select %235, %183, %128 : vector<8x128xi1>, vector<8x128xf32>
    %239 = arith.select %235, %185, %130 : vector<8x128xi1>, vector<8x128xf32>
    %240 = arith.select %235, %187, %132 : vector<8x128xi1>, vector<8x128xf32>
    %241 = arith.select %235, %189, %134 : vector<8x128xi1>, vector<8x128xf32>
    %242 = arith.select %235, %228, %173 : vector<8x128xi1>, vector<8x128xf32>
    %243 = arith.select %235, %230, %175 : vector<8x128xi1>, vector<8x128xf32>
    %244 = arith.select %235, %232, %177 : vector<8x128xi1>, vector<8x128xf32>
    %245 = arith.select %235, %234, %179 : vector<8x128xi1>, vector<8x128xf32>
    %246 = arith.subf %237, %242 : vector<8x128xf32>
    %247 = arith.mulf %246, %246 : vector<8x128xf32>
    %248 = arith.subf %238, %243 : vector<8x128xf32>
    %249 = arith.mulf %248, %248 : vector<8x128xf32>
    %250 = arith.addf %247, %249 : vector<8x128xf32>
    %251 = math.sqrt %239 : vector<8x128xf32>
    %252 = math.sqrt %244 : vector<8x128xf32>
    %253 = arith.subf %251, %252 : vector<8x128xf32>
    %254 = arith.mulf %253, %253 : vector<8x128xf32>
    %255 = math.sqrt %240 : vector<8x128xf32>
    %256 = math.sqrt %245 : vector<8x128xf32>
    %257 = arith.subf %255, %256 : vector<8x128xf32>
    %258 = arith.mulf %257, %257 : vector<8x128xf32>
    %259 = arith.addf %254, %258 : vector<8x128xf32>
    %260 = arith.subf %241, %236 : vector<8x128xf32>
    %261 = arith.mulf %260, %260 : vector<8x128xf32>
    %262 = arith.addf %250, %259 : vector<8x128xf32>
    %cst_152 = arith.constant 5.000000e+00 : f32
    %263 = vector.broadcast %cst_152 : f32 to vector<8x128xf32>
    %264 = arith.mulf %263, %262 : vector<8x128xf32>
    %265 = arith.addf %264, %261 : vector<8x128xf32>
    %266 = arith.addf %265, %93 : vector<8x128xf32>
    %267 = arith.select %6, %266, %9 : vector<8x128xi1>, vector<8x128xf32>
    %268 = arith.select %8, %23, %9 : vector<8x128xi1>, vector<8x128xf32>
    %cst_153 = arith.constant 5.000000e-01 : f32
    %269 = vector.broadcast %cst_153 : f32 to vector<8x128xf32>
    %270 = arith.mulf %269, %268 : vector<8x128xf32>
    %271 = arith.addf %267, %270 : vector<8x128xf32>
    %c0_154 = arith.constant 0 : index
    %c0_155 = arith.constant 0 : index
    %272 = vector.load %arg5[%c0_154, %c0_155] : memref<8x128xf32, #tpu.memory_space<vmem>>, vector<8x128xf32>
    %273 = arith.addf %272, %271 : vector<8x128xf32>
    %c0_156 = arith.constant 0 : index
    %c0_157 = arith.constant 0 : index
    %274 = vector.load %arg5[%c0_156, %c0_157] : memref<8x128xf32, #tpu.memory_space<vmem>>, vector<8x128xf32>
    tpu.vector_store %arg5[%c0_156, %c0_157], %273 {strides = array<i32>} : memref<8x128xf32, #tpu.memory_space<vmem>>, vector<8x128xf32>,
    %c0_i32_158 = arith.constant 0 : i32
    %275 = arith.cmpi eq, %arg1, %c0_i32_158 : i32
    %276 = arith.extui %275 : i1 to i32
    %c0_i32_159 = arith.constant 0 : i32
    %277 = arith.cmpi ne, %276, %c0_i32_159 : i32
    scf.if %277 {
      %c0_160 = arith.constant 0 : index
      %c0_161 = arith.constant 0 : index
      %278 = vector.load %arg5[%c0_160, %c0_161] : memref<8x128xf32, #tpu.memory_space<vmem>>, vector<8x128xf32>
      %279 = vector.shape_cast %278 : vector<8x128xf32> to vector<1x8x128xf32>
      %cst_162 = arith.constant dense<0.000000e+00> : vector<1xf32>
      %280 = vector.multi_reduction <add>, %279, %cst_162 [1, 2] : vector<1x8x128xf32> to vector<1xf32>
      %281 = vector.shape_cast %280 : vector<1xf32> to vector<1x1x1xf32>
      %282 = vector.extract %281[0, 0, 0] : f32 from vector<1x1x1xf32>
      %283 = vector.broadcast %282 : f32 to vector<1x1xf32>
      %cst_163 = arith.constant 5.000000e-01 : f32
      %284 = vector.broadcast %cst_163 : f32 to vector<1x1xf32>
      %285 = arith.mulf %283, %284 : vector<1x1xf32>
      %286 = vector.shape_cast %285 : vector<1x1xf32> to vector<1x1xf32>
      %287 = vector.broadcast %286 : vector<1x1xf32> to vector<8x128xf32>
      %c0_164 = arith.constant 0 : index
      %c0_165 = arith.constant 0 : index
      %288 = vector.load %arg4[%c0_164, %c0_165] : memref<8x128xf32, #tpu.memory_space<vmem>>, vector<8x128xf32>
      tpu.vector_store %arg4[%c0_164, %c0_165], %287 {strides = array<i32>} : memref<8x128xf32, #tpu.memory_space<vmem>>, vector<8x128xf32>,
    } else {
    }
    return
  }
  func.func @transform_0(%arg0: i32, %arg1: i32) -> (i32, i32, i32) {
    %c1_i32 = arith.constant 1 : i32
    %0 = arith.muli %arg0, %c1_i32 : i32
    %1 = arith.addi %0, %arg1 : i32
    %c0_i32 = arith.constant 0 : i32
    %c0_i32_0 = arith.constant 0 : i32
    %c0_i32_1 = arith.constant 0 : i32
    return %c0_i32, %1, %c0_i32_0 : i32, i32, i32
  }
  func.func @transform_1(%arg0: i32, %arg1: i32) -> (i32, i32, i32) {
    %c1_i32 = arith.constant 1 : i32
    %0 = arith.muli %arg0, %c1_i32 : i32
    %1 = arith.addi %0, %arg1 : i32
    %c0_i32 = arith.constant 0 : i32
    %c0_i32_0 = arith.constant 0 : i32
    %c0_i32_1 = arith.constant 0 : i32
    return %c0_i32, %1, %c0_i32_0 : i32, i32, i32
  }
  func.func @transform_2(%arg0: i32, %arg1: i32) -> (i32, i32) {
    %c0_i32 = arith.constant 0 : i32
    %c0_i32_0 = arith.constant 0 : i32
    return %arg0, %c0_i32 : i32, i32
  }
}

</mosaic_0001>

<llo_original>
// kernel: tpu_custom_call.1
$region0: #{tpu_custom_call.1}
  #allocation0 [shape = 'u32[]', space=smem, size = 0x4, offset = 0x4, fixed_abs, tag = 'smem constant byte address 0x4 - core index']
  #allocation1 [shape = 'u32[72,128]{1,0:T(1,128)}', space=vmem, size = 0x9000, scoped, tag = 'internal scratch']
  #allocation2 [shape = 'f32[8,128]{1,0:T(8,128)}', space=vmem, size = 0x1000, scoped, tag = 'scratch operand']
  %s0 = inlined_call_operand.hbm [shape: f32[20,16,128], index: 0, kind: input, shape index: {}]
  %s1 = inlined_call_operand.hbm [shape: f32[20,16,128], index: 1, kind: input, shape index: {}]
  %s2 = inlined_call_operand.hbm [shape: f32[16,128], index: 2, kind: output, shape index: {}]
  %s3 = sld [smem:[#allocation0]]
  $region57: #{tpu_custom_call.1} parent=0
    _
  %s5 = ssub.s32 1, %s3
  %s6 = scalar_select 0, %s5, %s3
  $region1: #{tpu_custom_call.1} parent=0
    #allocation3 [shape = 'u8[163840]{0}', space=vmem, size = 0x28000, scoped, tag = 'input window, operand 0']
    #allocation4 [shape = 's32[2]{0}', space=sflag, size = 0x8, scoped, tag = 'scoped memory for tpu_custom_call.1']
    #allocation5 [shape = 's32[2]{0}', space=sflag, size = 0x8, scoped, tag = 'scoped memory for tpu_custom_call.1']
    #allocation6 [shape = 'u8[163840]{0}', space=vmem, size = 0x28000, scoped, tag = 'input window, operand 1']
    #allocation7 [shape = 's32[2]{0}', space=sflag, size = 0x8, scoped, tag = 'scoped memory for tpu_custom_call.1']
    #allocation8 [shape = 'u8[8192]{0}', space=vmem, size = 0x2000, scoped, tag = 'output window, operand 0']
    %7 = vsyncpa [#allocation4], 0
    %s8 = scalar_lea.sflag [#allocation4], 1
    %9 = vsyncpa %s8, 0
    %10 = vsyncpa [#allocation7], 0
    %s11 = scalar_lea.sflag [#allocation7], 1
    %12 = vsyncpa %s11, 0
    %13 = vsyncpa [#allocation5], 0
    %s14 = scalar_lea.sflag [#allocation5], 1
    %15 = vsyncpa %s14, 0
    loop: start=0, step=1, limit=4
    $region2: #{tpu_custom_call.1} parent=1 // loop_pre_header
      _
    $region3: #{tpu_custom_call.1} parent=1 // loop_header
      %s17 = sphi 0, %s21
      %p18 = scmp.ge.s32.totalorder %s17, 4
      %s24 = sphi 0, %s36
      %s25 = sphi 0, %s32
      %s26 = sphi 0, %s24
      %s27 = sphi 0, %s25
      %s28 = sphi 0, %s26
      %s29 = sphi 0, %s27
      %s41 = sphi 0, %s43
      %s44 = sphi 0, %s41
      %s45 = sphi 0, %s44
      %s61 = sphi 0, %s45
      %s69 = sphi 0, %s71
      %s72 = sphi 0, %s69
      %s73 = sphi 0, %s72
      %s89 = sphi 0, %s73
      %s95 = sphi 0, %s97
      %s98 = sphi 0, %s95
      %s99 = sphi 0, %s98
      %s115 = sphi 0, %s99
    $region4: #{tpu_custom_call.1} parent=1 // loop_header_branch
      %20 = sbr.rel (%p18) target = $region8
    $region5: #{tpu_custom_call.1} parent=1 // loop_body
      %s22 = ssub.s32 %s17, 1
      %s23 = ssub.s32 %s17, 2
      %s30 = sadd.s32 1, %s25
      %p31 = scmp.ge.s32.totalorder %s30, 1
      %s32 = scalar_select %p31, 0, %s30
      %s33 = sadd.s32 1, %s24
      %s34 = scalar_select %p31, %s33, %s24
      %p35 = scmp.ge.s32.totalorder %s34, 2
      %s36 = scalar_select %p35, 0, %s34
      %s37 = sadd.s32 %s24, %s25
      %s38 = sadd.s32 %s36, %s32
      %s39 = ssub.s32 %s37, %s38
      %p40 = scmp.eq.s32.totalorder %s39, 0
      %s42 = sadd.s32 %s41, 1
      %s43 = scalar_select %p40, %s41, %s42
      %p46 = pneg %p40
      %p47 = scmp.eq.s32.totalorder %s17, 1
      %p48 = por %p46, %p47
      %p49 = scmp.ne.s32.totalorder %s41, %s44
      %p50 = scmp.eq.s32.totalorder %s17, 0
      %p51 = por %p49, %p50
      %p52 = scmp.ne.s32.totalorder %s41, %s44
      %p53 = scmp.eq.s32.totalorder %s22, 1
      %p54 = por %p52, %p53
      %p55 = scmp.ne.s32.totalorder %s44, %s45
      %p56 = scmp.eq.s32.totalorder %s22, 0
      %p57 = por %p55, %p56
      %p58 = scmp.ne.s32.totalorder %s44, %s45
      %p59 = scmp.eq.s32.totalorder %s23, 1
      %p60 = por %p58, %p59
      %p62 = scmp.ne.s32.totalorder %s45, %s61
      %p63 = scmp.eq.s32.totalorder %s23, 0
      %p64 = por %p62, %p63
      %s65 = sadd.s32 %s24, %s25
      %s66 = sadd.s32 %s36, %s32
      %s67 = ssub.s32 %s65, %s66
      %p68 = scmp.eq.s32.totalorder %s67, 0
      %s70 = sadd.s32 %s69, 1
      %s71 = scalar_select %p68, %s69, %s70
      %p74 = pneg %p68
      %p75 = scmp.eq.s32.totalorder %s17, 1
      %p76 = por %p74, %p75
      %p77 = scmp.ne.s32.totalorder %s69, %s72
      %p78 = scmp.eq.s32.totalorder %s17, 0
      %p79 = por %p77, %p78
      %p80 = scmp.ne.s32.totalorder %s69, %s72
      %p81 = scmp.eq.s32.totalorder %s22, 1
      %p82 = por %p80, %p81
      %p83 = scmp.ne.s32.totalorder %s72, %s73
      %p84 = scmp.eq.s32.totalorder %s22, 0
      %p85 = por %p83, %p84
      %p86 = scmp.ne.s32.totalorder %s72, %s73
      %p87 = scmp.eq.s32.totalorder %s23, 1
      %p88 = por %p86, %p87
      %p90 = scmp.ne.s32.totalorder %s73, %s89
      %p91 = scmp.eq.s32.totalorder %s23, 0
      %p92 = por %p90, %p91
      %s93 = ssub.s32 %s24, %s36
      %p94 = scmp.eq.s32.totalorder %s93, 0
      %s96 = sadd.s32 %s95, 1
      %s97 = scalar_select %p94, %s95, %s96
      %p100 = pneg %p94
      %p101 = scmp.eq.s32.totalorder %s17, 1
      %p102 = por %p100, %p101
      %p103 = scmp.ne.s32.totalorder %s95, %s98
      %p104 = scmp.eq.s32.totalorder %s17, 0
      %p105 = por %p103, %p104
      %p106 = scmp.ne.s32.totalorder %s95, %s98
      %p107 = scmp.eq.s32.totalorder %s22, 1
      %p108 = por %p106, %p107
      %p109 = scmp.ne.s32.totalorder %s98, %s99
      %p110 = scmp.eq.s32.totalorder %s22, 0
      %p111 = por %p109, %p110
      %p112 = scmp.ne.s32.totalorder %s98, %s99
      %p113 = scmp.eq.s32.totalorder %s23, 1
      %p114 = por %p112, %p113
      %p116 = scmp.ne.s32.totalorder %s99, %s115
      %p117 = scmp.eq.s32.totalorder %s23, 0
      %p118 = por %p116, %p117
      %p119 = scmp.le.s32.totalorder 1, %s17
      %p120 = scmp.lt.s32.totalorder %s17, 3
      %p121 = pnand %p119, %p120
      %p122 = pneg %p121
      // Predicated region
      $region9: #{tpu_custom_call.1} parent=5 // pred_check
        _
      $region10: #{tpu_custom_call.1} parent=5 // pred_check_branch
        %124 = sbr.rel (%p121) target = $region12
      $region11: #{tpu_custom_call.1} parent=5 // pred_region
        %s125 = ssub.s32 %s17, 1
      $region12: #{tpu_custom_call.1} parent=5 // pred_fallthru
        _
      %p126 = scmp.lt.s32.totalorder %s17, 2
      // Predicated region
      $region13: #{tpu_custom_call.1} parent=5 // pred_check
        %p127 = pneg %p126
      $region14: #{tpu_custom_call.1} parent=5 // pred_check_branch
        %129 = sbr.rel (%p127) target = $region16
      $region15: #{tpu_custom_call.1} parent=5 // pred_region
        // Predicated region
        $region17: #{tpu_custom_call.1} parent=15 // pred_check
          %p130 = pneg %p51
        $region18: #{tpu_custom_call.1} parent=15 // pred_check_branch
          %132 = sbr.rel (%p130) target = $region20
        $region19: #{tpu_custom_call.1} parent=15 // pred_region
          %s133 = sand.u32 %s41, 1
          %s134 = scalar_lea.sflag [#allocation4], %s133
          %s135 = sand.u32 %s41, 1
          %s136 = smul.addr %s135, 160
          %s137 = scalar_lea.vmem [#allocation3], %s136
          %s138 = sadd.s32 %s24, %s25
          %140 = vsyncadd %s134, 0
          %s141 = smul.addr %s138, 8
          %s142 = scalar_lea.hbm %s0, %s141
          %s143 = sshll.u32 %s142, 4
          %s144 = int_to_ptr.hbm [resolvable:$true] %s143
          %s145 = sshll.u32 %s137, 4
          %s146 = int_to_ptr.vmem [resolvable:$true] %s145
          %151 = dma.hbm_to_vmem [thread:$0]  %s144, 2560, %s146, %s134, 256, 128, 8
        $region20: #{tpu_custom_call.1} parent=15 // pred_fallthru
          _
        // Predicated region
        $region21: #{tpu_custom_call.1} parent=15 // pred_check
          %p152 = pneg %p79
        $region22: #{tpu_custom_call.1} parent=15 // pred_check_branch
          %154 = sbr.rel (%p152) target = $region24
        $region23: #{tpu_custom_call.1} parent=15 // pred_region
          %s155 = sand.u32 %s69, 1
          %s156 = scalar_lea.sflag [#allocation7], %s155
          %s157 = sand.u32 %s69, 1
          %s158 = smul.addr %s157, 160
          %s159 = scalar_lea.vmem [#allocation6], %s158
          %s160 = sadd.s32 %s24, %s25
          %162 = vsyncadd %s156, 0
          %s163 = smul.addr %s160, 8
          %s164 = scalar_lea.hbm %s1, %s163
          %s165 = sshll.u32 %s164, 4
          %s166 = int_to_ptr.hbm [resolvable:$true] %s165
          %s167 = sshll.u32 %s159, 4
          %s168 = int_to_ptr.vmem [resolvable:$true] %s167
          %173 = dma.hbm_to_vmem [thread:$0]  %s166, 2560, %s168, %s156, 256, 128, 8
        $region24: #{tpu_custom_call.1} parent=15 // pred_fallthru
          _
      $region16: #{tpu_custom_call.1} parent=5 // pred_fallthru
        _
      %p174 = scmp.le.s32.totalorder 1, %s17
      %p175 = scmp.lt.s32.totalorder %s17, 3
      %p176 = pnand %p174, %p175
      %p177 = pneg %p176
      // Predicated region
      $region25: #{tpu_custom_call.1} parent=5 // pred_check
        _
      $region26: #{tpu_custom_call.1} parent=5 // pred_check_branch
        %179 = sbr.rel (%p176) target = $region28
      $region27: #{tpu_custom_call.1} parent=5 // pred_region
        %s180 = ssub.s32 %s17, 1
        %s181 = sand.u32 %s44, 1
        %s182 = scalar_lea.sflag [#allocation4], %s181
        %s183 = sand.u32 %s44, 1
        %s184 = smul.addr %s183, 160
        %s185 = scalar_lea.vmem [#allocation3], %s184
        // Predicated region
        $region29: #{tpu_custom_call.1} parent=27 // pred_check
          %p186 = pneg %p57
        $region30: #{tpu_custom_call.1} parent=27 // pred_check_branch
          %188 = sbr.rel (%p186) target = $region32
        $region31: #{tpu_custom_call.1} parent=27 // pred_region
          %190 = dma.done %s182, 2560
        $region32: #{tpu_custom_call.1} parent=27 // pred_fallthru
          _
        %s191 = sand.u32 %s72, 1
        %s192 = scalar_lea.sflag [#allocation7], %s191
        %s193 = sand.u32 %s72, 1
        %s194 = smul.addr %s193, 160
        %s195 = scalar_lea.vmem [#allocation6], %s194
        // Predicated region
        $region33: #{tpu_custom_call.1} parent=27 // pred_check
          %p196 = pneg %p85
        $region34: #{tpu_custom_call.1} parent=27 // pred_check_branch
          %198 = sbr.rel (%p196) target = $region36
        $region35: #{tpu_custom_call.1} parent=27 // pred_region
          %200 = dma.done %s192, 2560
        $region36: #{tpu_custom_call.1} parent=27 // pred_fallthru
          _
        %s201 = sand.u32 %s44, 1
        %s202 = scalar_lea.sflag [#allocation4], %s201
        %s203 = sand.u32 %s44, 1
        %s204 = smul.addr %s203, 160
        %s205 = scalar_lea.vmem [#allocation3], %s204
        %p206 = pneg %p57
        %p207 = pneg %p54
        %s208 = sand.u32 %s72, 1
        %s209 = scalar_lea.sflag [#allocation7], %s208
        %s210 = sand.u32 %s72, 1
        %s211 = smul.addr %s210, 160
        %s212 = scalar_lea.vmem [#allocation6], %s211
        %p213 = pneg %p85
        %p214 = pneg %p82
        %p215 = pneg %p111
        %p216 = pneg %p108
        %s217 = sand.u32 %s98, 1
        %s218 = scalar_lea.sflag [#allocation5], %s217
        %s219 = sand.u32 %s98, 1
        %s220 = smul.addr %s219, 8
        %s221 = scalar_lea.vmem [#allocation8], %s220
        %s222 = sadd.s32 %s26, %s27
        %s223 = sadd.s32 %s26, %s27
        %p224 = scmp.eq.s32.totalorder %s27, 0
        // Predicated region
        $region37: #{tpu_custom_call.1} parent=27 // pred_check
          %p225 = pneg %p224
        $region38: #{tpu_custom_call.1} parent=27 // pred_check_branch
          %227 = sbr.rel (%p225) target = $region40
        $region39: #{tpu_custom_call.1} parent=27 // pred_region
          %228 = vst [vmem:[#allocation2] sm:$0xff] 0.0
        $region40: #{tpu_custom_call.1} parent=27 // pred_fallthru
          _
        %s229 = scalar_lea.vmem %s195, 32 [#allocation6]
        %v230 = vld [vmem:[%s229] sm:$0xff]
        %vm231 = vcmp.gt.f32.partialorder %v230, 0.0
        %vm232 = vcmp.eq.f32.partialorder %v230, 0.0
        %s233 = scalar_lea.vmem %s185, 32 [#allocation3]
        %v234 = vld [vmem:[%s233] sm:$0xff]
        %v235 = vsub.f32 %v234, %v230
        %v236 = vmul.f32 %v235, %v235
        %v237 = vadd.f32 %v236, 0.0
        %s238 = scalar_lea.vmem %s185, 72 [#allocation3]
        %v239 = vld [vmem:[%s238] sm:$0xff]
        %s240 = scalar_lea.vmem %s195, 72 [#allocation6]
        %v241 = vld [vmem:[%s240] sm:$0xff]
        %v242 = vsub.f32 %v239, %v241
        %v243 = vmul.f32 %v242, %v242
        %v244 = vadd.f32 %v237, %v243
        %s245 = scalar_lea.vmem %s185, 80 [#allocation3]
        %v246 = vld [vmem:[%s245] sm:$0xff]
        %s247 = scalar_lea.vmem %s195, 80 [#allocation6]
        %v248 = vld [vmem:[%s247] sm:$0xff]
        %v249 = vsub.f32 %v246, %v248
        %v250 = vmul.f32 %v249, %v249
        %v251 = vadd.f32 %v250, 0.0
        %s252 = scalar_lea.vmem %s185, 88 [#allocation3]
        %v253 = vld [vmem:[%s252] sm:$0xff]
        %s254 = scalar_lea.vmem %s195, 88 [#allocation6]
        %v255 = vld [vmem:[%s254] sm:$0xff]
        %v256 = vsub.f32 %v253, %v255
        %v257 = vmul.f32 %v256, %v256
        %v258 = vadd.f32 %v251, %v257
        %s259 = scalar_lea.vmem %s185, 96 [#allocation3]
        %v260 = vld [vmem:[%s259] sm:$0xff]
        %s261 = scalar_lea.vmem %s195, 96 [#allocation6]
        %v262 = vld [vmem:[%s261] sm:$0xff]
        %v263 = vsub.f32 %v260, %v262
        %v264 = vmul.f32 %v263, %v263
        %v265 = vadd.f32 %v258, %v264
        %s266 = scalar_lea.vmem %s185, 104 [#allocation3]
        %v267 = vld [vmem:[%s266] sm:$0xff]
        %s268 = scalar_lea.vmem %s195, 104 [#allocation6]
        %v269 = vld [vmem:[%s268] sm:$0xff]
        %v270 = vsub.f32 %v267, %v269
        %v271 = vmul.f32 %v270, %v270
        %v272 = vadd.f32 %v265, %v271
        %s273 = scalar_lea.vmem %s185, 112 [#allocation3]
        %v274 = vld [vmem:[%s273] sm:$0xff]
        %s275 = scalar_lea.vmem %s195, 112 [#allocation6]
        %v276 = vld [vmem:[%s275] sm:$0xff]
        %v277 = vsub.f32 %v274, %v276
        %v278 = vmul.f32 %v277, %v277
        %v279 = vadd.f32 %v272, %v278
        %s280 = scalar_lea.vmem %s185, 120 [#allocation3]
        %v281 = vld [vmem:[%s280] sm:$0xff]
        %s282 = scalar_lea.vmem %s195, 120 [#allocation6]
        %v283 = vld [vmem:[%s282] sm:$0xff]
        %v284 = vsub.f32 %v281, %v283
        %v285 = vmul.f32 %v284, %v284
        %v286 = vadd.f32 %v279, %v285
        %s287 = scalar_lea.vmem %s185, 128 [#allocation3]
        %v288 = vld [vmem:[%s287] sm:$0xff]
        %s289 = scalar_lea.vmem %s195, 128 [#allocation6]
        %v290 = vld [vmem:[%s289] sm:$0xff]
        %v291 = vsub.f32 %v288, %v290
        %v292 = vmul.f32 %v291, %v291
        %v293 = vadd.f32 %v286, %v292
        %s294 = scalar_lea.vmem %s185, 136 [#allocation3]
        %v295 = vld [vmem:[%s294] sm:$0xff]
        %s296 = scalar_lea.vmem %s195, 136 [#allocation6]
        %v297 = vld [vmem:[%s296] sm:$0xff]
        %v298 = vsub.f32 %v295, %v297
        %v299 = vmul.f32 %v298, %v298
        %v300 = vadd.f32 %v293, %v299
        %s301 = scalar_lea.vmem %s185, 144 [#allocation3]
        %v302 = vld [vmem:[%s301] sm:$0xff]
        %s303 = scalar_lea.vmem %s195, 144 [#allocation6]
        %v304 = vld [vmem:[%s303] sm:$0xff]
        %v305 = vsub.f32 %v302, %v304
        %v306 = vmul.f32 %v305, %v305
        %v307 = vadd.f32 %v300, %v306
        %s308 = scalar_lea.vmem %s185, 152 [#allocation3]
        %v309 = vld [vmem:[%s308] sm:$0xff]
        %s310 = scalar_lea.vmem %s195, 152 [#allocation6]
        %v311 = vld [vmem:[%s310] sm:$0xff]
        %v312 = vsub.f32 %v309, %v311
        %v313 = vmul.f32 %v312, %v312
        %v314 = vadd.f32 %v307, %v313
        %v315 = vld [vmem:[%s195] sm:$0xff]
        %s316 = scalar_lea.vmem %s195, 8 [#allocation6]
        %v317 = vld [vmem:[%s316] sm:$0xff]
        %s318 = scalar_lea.vmem %s195, 16 [#allocation6]
        %v319 = vld [vmem:[%s318] sm:$0xff]
        %s320 = scalar_lea.vmem %s195, 24 [#allocation6]
        %v321 = vld [vmem:[%s320] sm:$0xff]
        %v322 = vmul.f32 %v315, 0.14285715
        %v323 = vmul.f32 %v319, 0.5
        %v324 = vsub.f32 %v322, %v323
        %v325 = vmul.f32 %v317, 0.14285715
        %v326 = vmul.f32 %v321, 0.5
        %v327 = vsub.f32 %v325, %v326
        %v328 = vadd.f32 %v322, %v323
        %v329 = vadd.f32 %v325, %v326
        %v330 = vsub.f32 %v328, %v324
        %v331 = vsub.f32 %v329, %v327
        %v332 = vmul.f32 %v330, %v331
        %v333 = vld [vmem:[%s185] sm:$0xff]
        %s334 = scalar_lea.vmem %s185, 8 [#allocation3]
        %v335 = vld [vmem:[%s334] sm:$0xff]
        %s336 = scalar_lea.vmem %s185, 16 [#allocation3]
        %v337 = vld [vmem:[%s336] sm:$0xff]
        %s338 = scalar_lea.vmem %s185, 24 [#allocation3]
        %v339 = vld [vmem:[%s338] sm:$0xff]
        %v340 = vmul.f32 %v333, 0.14285715
        %v341 = vmul.f32 %v337, 0.5
        %v342 = vsub.f32 %v340, %v341
        %v343 = vmul.f32 %v335, 0.14285715
        %v344 = vmul.f32 %v339, 0.5
        %v345 = vsub.f32 %v343, %v344
        %v346 = vadd.f32 %v340, %v341
        %v347 = vadd.f32 %v343, %v344
        %v348 = vmin.f32 %v346, %v328
        %v349 = vmax.f32 %v342, %v324
        %v350 = vsub.f32 %v348, %v349
        %v351 = vmax.f32 %v350, 0.0
        %v352 = vmin.f32 %v347, %v329
        %v353 = vmax.f32 %v345, %v327
        %v354 = vsub.f32 %v352, %v353
        %v355 = vmax.f32 %v354, 0.0
        %v356 = vmul.f32 %v351, %v355
        %v357 = vsub.f32 %v346, %v342
        %v358 = vsub.f32 %v347, %v345
        %v359 = vmul.f32 %v357, %v358
        %v360 = vadd.f32 %v359, %v332
        %v361 = vsub.f32 %v360, %v356
        %v362 = vrcp.pop %v361
        %v363 = vmul.f32 %v361, %v362
        %v364 = vsub.f32 1.0, %v363
        %v365 = vmul.f32 %v362, %v364
        %v366 = vadd.f32 %v362, %v365
        %vm367 = vweird.f32 %v361
        %vm368 = vweird.f32 %v362
        %vm369 = vmor %vm367, %vm368
        %v370 = vsel %vm369, %v362, %v366
        %v371 = vand.u32 2147483647, %v361
        %vm372 = vcmp.eq.f32.partialorder %v371, 8.507059e+37
        %v373 = vand.u32 %v361, 2147483648
        %v374 = vor.u32 1.1754944e-38, %v373
        %v375 = vsel %vm372, %v374, %v370
        %v376 = vmul.f32 %v356, %v375
        %s377 = scalar_lea.vmem %s185, 40 [#allocation3]
        %v378 = vld [vmem:[%s377] sm:$0xff]
        %s379 = scalar_lea.vmem %s185, 48 [#allocation3]
        %v380 = vld [vmem:[%s379] sm:$0xff]
        %s381 = scalar_lea.vmem %s185, 56 [#allocation3]
        %v382 = vld [vmem:[%s381] sm:$0xff]
        %s383 = scalar_lea.vmem %s185, 64 [#allocation3]
        %v384 = vld [vmem:[%s383] sm:$0xff]
        %v385 = vmul.f32 %v378, 0.14285715
        %v386 = vmul.f32 %v382, 0.5
        %v387 = vsub.f32 %v385, %v386
        %v388 = vmul.f32 %v380, 0.14285715
        %v389 = vmul.f32 %v384, 0.5
        %v390 = vsub.f32 %v388, %v389
        %v391 = vadd.f32 %v385, %v386
        %v392 = vadd.f32 %v388, %v389
        %v393 = vmin.f32 %v391, %v328
        %v394 = vmax.f32 %v387, %v324
        %v395 = vsub.f32 %v393, %v394
        %v396 = vmax.f32 %v395, 0.0
        %v397 = vmin.f32 %v392, %v329
        %v398 = vmax.f32 %v390, %v327
        %v399 = vsub.f32 %v397, %v398
        %v400 = vmax.f32 %v399, 0.0
        %v401 = vmul.f32 %v396, %v400
        %v402 = vsub.f32 %v391, %v387
        %v403 = vsub.f32 %v392, %v390
        %v404 = vmul.f32 %v402, %v403
        %v405 = vadd.f32 %v404, %v332
        %v406 = vsub.f32 %v405, %v401
        %v407 = vrcp.pop %v406
        %v408 = vmul.f32 %v406, %v407
        %v409 = vsub.f32 1.0, %v408
        %v410 = vmul.f32 %v407, %v409
        %v411 = vadd.f32 %v407, %v410
        %vm412 = vweird.f32 %v406
        %vm413 = vweird.f32 %v407
        %vm414 = vmor %vm412, %vm413
        %v415 = vsel %vm414, %v407, %v411
        %v416 = vand.u32 2147483647, %v406
        %vm417 = vcmp.eq.f32.partialorder %v416, 8.507059e+37
        %v418 = vand.u32 %v406, 2147483648
        %v419 = vor.u32 1.1754944e-38, %v418
        %v420 = vsel %vm417, %v419, %v415
        %v421 = vmul.f32 %v401, %v420
        %s422 = scalar_lea.vmem %s195, 40 [#allocation6]
        %v423 = vld [vmem:[%s422] sm:$0xff]
        %s424 = scalar_lea.vmem %s195, 48 [#allocation6]
        %v425 = vld [vmem:[%s424] sm:$0xff]
        %s426 = scalar_lea.vmem %s195, 56 [#allocation6]
        %v427 = vld [vmem:[%s426] sm:$0xff]
        %s428 = scalar_lea.vmem %s195, 64 [#allocation6]
        %v429 = vld [vmem:[%s428] sm:$0xff]
        %vm430 = vcmp.gt.f32.partialorder %v421, %v376
        %v431 = vsel %vm430, %v421, %v376
        %v432 = vsel %vm430, %v378, %v333
        %v433 = vsel %vm430, %v380, %v335
        %v434 = vsel %vm430, %v382, %v337
        %v435 = vsel %vm430, %v384, %v339
        %v436 = vsel %vm430, %v239, %v234
        %v437 = vsel %vm430, %v423, %v315
        %v438 = vsel %vm430, %v425, %v317
        %v439 = vsel %vm430, %v427, %v319
        %v440 = vsel %vm430, %v429, %v321
        %v441 = vsub.f32 %v432, %v437
        %v442 = vmul.f32 %v441, %v441
        %v443 = vsub.f32 %v433, %v438
        %v444 = vmul.f32 %v443, %v443
        %v445 = vadd.f32 %v442, %v444
        %v446 = vrsqrt.pop %v434
        %v447 = vmul.f32 %v446, %v434
        %v448 = vmul.f32 %v447, %v446
        %v449 = vmul.f32 0.5, %v448
        %v450 = vsub.f32 1.5, %v449
        %v451 = vmul.f32 %v446, %v450
        %v452 = vmul.f32 %v434, %v451
        %vm453 = vcmp.eq.f32.partialorder %v434, inf
        %v454 = vsel %vm453, %v434, %v452
        %vm455 = vcmp.eq.f32.partialorder %v434, 0.0
        %v456 = vand.u32 %v434, 2147483648
        %v457 = vsel %vm455, %v456, %v454
        %v458 = vrsqrt.pop %v439
        %v459 = vmul.f32 %v458, %v439
        %v460 = vmul.f32 %v459, %v458
        %v461 = vmul.f32 0.5, %v460
        %v462 = vsub.f32 1.5, %v461
        %v463 = vmul.f32 %v458, %v462
        %v464 = vmul.f32 %v439, %v463
        %vm465 = vcmp.eq.f32.partialorder %v439, inf
        %v466 = vsel %vm465, %v439, %v464
        %vm467 = vcmp.eq.f32.partialorder %v439, 0.0
        %v468 = vand.u32 %v439, 2147483648
        %v469 = vsel %vm467, %v468, %v466
        %v470 = vsub.f32 %v457, %v469
        %v471 = vmul.f32 %v470, %v470
        %v472 = vrsqrt.pop %v435
        %v473 = vmul.f32 %v472, %v435
        %v474 = vmul.f32 %v473, %v472
        %v475 = vmul.f32 0.5, %v474
        %v476 = vsub.f32 1.5, %v475
        %v477 = vmul.f32 %v472, %v476
        %v478 = vmul.f32 %v435, %v477
        %vm479 = vcmp.eq.f32.partialorder %v435, inf
        %v480 = vsel %vm479, %v435, %v478
        %vm481 = vcmp.eq.f32.partialorder %v435, 0.0
        %v482 = vand.u32 %v435, 2147483648
        %v483 = vsel %vm481, %v482, %v480
        %v484 = vrsqrt.pop %v440
        %v485 = vmul.f32 %v484, %v440
        %v486 = vmul.f32 %v485, %v484
        %v487 = vmul.f32 0.5, %v486
        %v488 = vsub.f32 1.5, %v487
        %v489 = vmul.f32 %v484, %v488
        %v490 = vmul.f32 %v440, %v489
        %vm491 = vcmp.eq.f32.partialorder %v440, inf
        %v492 = vsel %vm491, %v440, %v490
        %vm493 = vcmp.eq.f32.partialorder %v440, 0.0
        %v494 = vand.u32 %v440, 2147483648
        %v495 = vsel %vm493, %v494, %v492
        %v496 = vsub.f32 %v483, %v495
        %v497 = vmul.f32 %v496, %v496
        %v498 = vadd.f32 %v471, %v497
        %v499 = vsub.f32 %v436, %v431
        %v500 = vmul.f32 %v499, %v499
        %v501 = vadd.f32 %v445, %v498
        %v502 = vmul.f32 %v501, 5.0
        %v503 = vadd.f32 %v502, %v500
        %v504 = vadd.f32 %v503, %v314
        %v505 = vsel %vm231, %v504, 0.0
        %v506 = vsel %vm232, %v244, 0.0
        %v507 = vmul.f32 %v506, 0.5
        %v508 = vadd.f32 %v505, %v507
        %v509 = vld [vmem:[#allocation2] sm:$0xff]
        %v510 = vadd.f32 %v509, %v508
        %511 = vst [vmem:[#allocation2] sm:$0xff] %v510
        // Predicated region
        $region41: #{tpu_custom_call.1} parent=27 // pred_check
          %p512 = pneg %p224
        $region42: #{tpu_custom_call.1} parent=27 // pred_check_branch
          %514 = sbr.rel (%p512) target = $region44
        $region43: #{tpu_custom_call.1} parent=27 // pred_region
          %v515 = vld [vmem:[#allocation2] sm:$0xff]
          %516 = vadd.xlane.f32.xlu0 %v515
          %v517 = vpop.xlane.xlu0 %516
          %v518 = vrot.slane %v517, 4
          %v519 = vadd.f32 %v517, %v518
          %v520 = vrot.slane %v519, 2
          %v521 = vadd.f32 %v519, %v520
          %v522 = vrot.slane %v521, 1
          %v523 = vadd.f32 %v521, %v522
          %s524 = vtos %v523
          %v525 = vstv %s524
          %v526 = vmul.f32 %v525, 0.5
          %527 = vst [vmem:[%s221] sm:$0xff] %v526
        $region44: #{tpu_custom_call.1} parent=27 // pred_fallthru
          _
        %s528 = sand.u32 %s98, 1
        %s529 = scalar_lea.sflag [#allocation5], %s528
        %s530 = sand.u32 %s98, 1
        %s531 = smul.addr %s530, 8
        %s532 = scalar_lea.vmem [#allocation8], %s531
        // Predicated region
        $region45: #{tpu_custom_call.1} parent=27 // pred_check
          %p533 = pneg %p108
        $region46: #{tpu_custom_call.1} parent=27 // pred_check_branch
          %535 = sbr.rel (%p533) target = $region48
        $region47: #{tpu_custom_call.1} parent=27 // pred_region
          %537 = vsyncadd %s529, 0
          %s538 = smul.addr %s26, 8
          %s539 = scalar_lea.hbm %s2, %s538
          %s541 = sshll.u32 %s532, 4
          %s542 = int_to_ptr.vmem [resolvable:$true] %s541
          %s543 = sshll.u32 %s539, 4
          %s544 = int_to_ptr.hbm [resolvable:$true] %s543
          %546 = dma.vmem_to_hbm [thread:$0]  %s542, 128, %s544, %s529
        $region48: #{tpu_custom_call.1} parent=27 // pred_fallthru
          _
      $region28: #{tpu_custom_call.1} parent=5 // pred_fallthru
        _
      %p547 = scmp.le.s32.totalorder 2, %s17
      // Predicated region
      $region49: #{tpu_custom_call.1} parent=5 // pred_check
        %p548 = pneg %p547
      $region50: #{tpu_custom_call.1} parent=5 // pred_check_branch
        %550 = sbr.rel (%p548) target = $region52
      $region51: #{tpu_custom_call.1} parent=5 // pred_region
        %s551 = ssub.s32 %s17, 2
        // Predicated region
        $region53: #{tpu_custom_call.1} parent=51 // pred_check
          %p552 = pneg %p114
        $region54: #{tpu_custom_call.1} parent=51 // pred_check_branch
          %554 = sbr.rel (%p552) target = $region56
        $region55: #{tpu_custom_call.1} parent=51 // pred_region
          %s555 = sand.u32 %s99, 1
          %s556 = scalar_lea.sflag [#allocation5], %s555
          %s557 = sand.u32 %s99, 1
          %s558 = smul.addr %s557, 8
          %s559 = scalar_lea.vmem [#allocation8], %s558
          %561 = dma.done %s556, 128
        $region56: #{tpu_custom_call.1} parent=51 // pred_fallthru
          _
      $region52: #{tpu_custom_call.1} parent=5 // pred_fallthru
        _
    $region6: #{tpu_custom_call.1} parent=1 // loop_footer
      %s21 = sadd.s32 1, %s17
    $region7: #{tpu_custom_call.1} parent=1 // loop_footer_branch
      %16 = sbr.rel target = $region3
    $region8: #{tpu_custom_call.1} parent=1 // loop_exit
      _
    %562 = vsyncpa [#allocation4], 1
    %s563 = scalar_lea.sflag [#allocation4], 1
    %564 = vsyncpa %s563, 1
    %565 = vsyncpa [#allocation7], 1
    %s566 = scalar_lea.sflag [#allocation7], 1
    %567 = vsyncpa %s566, 1
    %568 = vsyncpa [#allocation5], 1
    %s569 = scalar_lea.sflag [#allocation5], 1
    %570 = vsyncpa %s569, 1

</llo_original>
